<compile_context>
chip_gen: v7x
topology: tpu7x:2x2x1
jax: 0.10.0
libtpu: 0.0.40
codegen_flags: <defaults>
</compile_context>

<pallas_src>
import functools

import jax
import jax.numpy as jnp
from jax.experimental import pallas as pl
from jax.experimental.pallas import tpu as pltpu


def _round_up(x: int, m: int) -> int:
    return (x + m - 1) // m * m


def plain_net_kernel(x_ref, w_ref, b_ref, o_ref):
    # x tile:(tile_b, K)  w tile:(K, tile_n)  b:(1, tile_n)  out:(tile_b, tile_n)
    x = x_ref[...]
    acc = jnp.dot(x, w_ref[...], preferred_element_type=jnp.float32)
    acc = acc + b_ref[...].astype(jnp.float32)
    o_ref[...] = jnp.maximum(acc, 0.0).astype(o_ref.dtype)


@functools.partial(jax.jit, static_argnames=("tile_b", "tile_n"))
def plain_net(x, w, b, *, tile_b: int | None = None, tile_n: int | None = None):
    """Plain_Net forward: ReLU(x @ w.T + b).

    x: (B, D_in)            activations
    w: (D_out, D_in)        PyTorch nn.Linear weight layout
    b: (D_out,)             bias
    """
    B, D_in = x.shape
    D_out = w.shape[0]

    LANE, SUB = 128, 8

    # Hoisted glue: transpose weight once, reshape bias once.
    w_t = jnp.transpose(w)          # (D_in, D_out)
    b_r = b.reshape(1, D_out)

    # Lane/sublane-dense padded sizes.
    K = _round_up(D_in, LANE)       # contraction dim
    N = _round_up(D_out, LANE)      # output feature dim

    # Tile sizes: batch tiles are multiples of 8 (f32 sublane), output tiles
    # multiples of 128 (lane).  Defaults target the 256-512 sweet spot for
    # real problem sizes but shrink gracefully for tiny demos.
    if tile_b is None:
        tile_b = min(_round_up(B, SUB), 512)
    tile_b = _round_up(tile_b, SUB)

    if tile_n is None:
        tile_n = min(N, 512)
    tile_n = _round_up(tile_n, LANE)
    if N % tile_n != 0:
        tile_n = N                   # keep divisibility exact

    Bp = _round_up(B, tile_b)        # padded batch -> grid divides exactly

    # Zero-pad once in the wrapper (padded rows/cols are sliced off below;
    # padded K columns contribute 0 to the dot product).
    x_p = x
    if (Bp, K) != (B, D_in):
        x_p = jnp.zeros((Bp, K), x.dtype).at[:B, :D_in].set(x)
    w_p = w_t
    if (K, N) != (D_in, D_out):
        w_p = jnp.zeros((K, N), w_t.dtype).at[:D_in, :D_out].set(w_t)
    b_p = b_r
    if N != D_out:
        b_p = jnp.zeros((1, N), b_r.dtype).at[:, :D_out].set(b_r)

    grid = (Bp // tile_b, N // tile_n)

    out = pl.pallas_call(
        plain_net_kernel,
        out_shape=jax.ShapeDtypeStruct((Bp, N), x.dtype),
        grid_spec=pltpu.PrefetchScalarGridSpec(
            num_scalar_prefetch=0,
            grid=grid,
            in_specs=[
                pl.BlockSpec((tile_b, K), lambda i, j: (i, 0)),   # x batch tile
                pl.BlockSpec((K, tile_n), lambda i, j: (0, j)),   # W^T N-tile
                pl.BlockSpec((1, tile_n), lambda i, j: (0, j)),   # bias N-tile
            ],
            out_specs=pl.BlockSpec((tile_b, tile_n), lambda i, j: (i, j)),
        ),
        compiler_params=pltpu.CompilerParams(
            dimension_semantics=("parallel", "parallel"),
            vmem_limit_bytes=48 * 1024 * 1024,   # explicit, v7x-safe (< 64 MiB)
        ),
    )(x_p, w_p, b_p)

    if (Bp, N) != (B, D_out):
        out = out[:B, :D_out]
    return out


# ---------------------------------------------------------------------------
# Init helpers matching the PyTorch module.
# ---------------------------------------------------------------------------
def _xavier_uniform(key, shape):
    fan_out, fan_in = shape
    limit = jnp.sqrt(6.0 / (fan_in + fan_out))
    return jax.random.uniform(key, shape, jnp.float32, -limit, limit)


def _linear_bias_default(key, fan_in, n):
    # PyTorch nn.Linear default bias init: U(-1/sqrt(fan_in), 1/sqrt(fan_in))
    bound = 1.0 / jnp.sqrt(fan_in)
    return jax.random.uniform(key, (n,), jnp.float32, -bound, bound)


if __name__ == "__main__":
    B, D_IN, D_OUT = 8, 32, 64       # small shapes consistent with the module

    key = jax.random.PRNGKey(0)
    k_x, k_w, k_b = jax.random.split(key, 3)

    x = jax.random.normal(k_x, (B, D_IN), jnp.float32)
    w = _xavier_uniform(k_w, (D_OUT, D_IN))          # linear1.weight (xavier)
    b = _linear_bias_default(k_b, D_IN, D_OUT)       # linear1.bias (default)

    y = plain_net(x, w, b)
    y = jax.block_until_ready(y)

    # Pure-JAX reference check: ReLU(x @ W.T + b)
    y_ref = jnp.maximum(x @ w.T + b, 0.0)
    assert y.shape == y_ref.shape, f"shape mismatch {y.shape} vs {y_ref.shape}"
    assert jnp.allclose(y, y_ref, atol=1e-5, rtol=1e-5), "mismatch vs reference"

    print("KERNEL_OK")
</pallas_src>

<mosaic_0001>
module attributes {stable_mosaic.version = 11 : i64} {
  func.func @plain_net_kernel(%arg0: i32, %arg1: i32, %arg2: memref<8x128xf32, #tpu.memory_space<vmem>>, %arg3: memref<128x128xf32, #tpu.memory_space<vmem>>, %arg4: memref<1x128xf32, #tpu.memory_space<vmem>>, %arg5: memref<8x128xf32, #tpu.memory_space<vmem>>) attributes {dimension_semantics = [#tpu.dimension_semantics<parallel>, #tpu.dimension_semantics<parallel>], iteration_bounds = array<i64: 1, 1>, scalar_prefetch = 0 : i64, scratch_operands = 0 : i64, tpu.core_type = #tpu.core_type<tc>, window_params = [{transform_indices = @transform_0, window_bounds = array<i64: 8, 128>}, {transform_indices = @transform_1, window_bounds = array<i64: 128, 128>}, {transform_indices = @transform_2, window_bounds = array<i64: 1, 128>}, {transform_indices = @transform_3, window_bounds = array<i64: 8, 128>}]} {
    %c0 = arith.constant 0 : index
    %c0_0 = arith.constant 0 : index
    %0 = vector.load %arg2[%c0, %c0_0] : memref<8x128xf32, #tpu.memory_space<vmem>>, vector<8x128xf32>
    %c0_1 = arith.constant 0 : index
    %c0_2 = arith.constant 0 : index
    %1 = vector.load %arg3[%c0_1, %c0_2] : memref<128x128xf32, #tpu.memory_space<vmem>>, vector<128x128xf32>
    %cst = arith.constant dense<0.000000e+00> : vector<8x128xf32>
    %2 = tpu.matmul %0, %1, %cst {dimension_numbers = #tpu.dot_dimension_numbers<[1], [0], [0], [1], [0, 0, 1, 1], [], []>} : vector<8x128xf32>, vector<128x128xf32>, vector<8x128xf32> -> vector<8x128xf32>
    %c0_3 = arith.constant 0 : index
    %c0_4 = arith.constant 0 : index
    %3 = vector.load %arg4[%c0_3, %c0_4] : memref<1x128xf32, #tpu.memory_space<vmem>>, vector<1x128xf32>
    %4 = vector.broadcast %3 : vector<1x128xf32> to vector<8x128xf32>
    %5 = arith.addf %2, %4 : vector<8x128xf32>
    %cst_5 = arith.constant 0.000000e+00 : f32
    %6 = vector.broadcast %cst_5 : f32 to vector<8x128xf32>
    %7 = arith.maximumf %5, %6 : vector<8x128xf32>
    %c0_6 = arith.constant 0 : index
    %c0_7 = arith.constant 0 : index
    %8 = vector.load %arg5[%c0_6, %c0_7] : memref<8x128xf32, #tpu.memory_space<vmem>>, vector<8x128xf32>
    tpu.vector_store %arg5[%c0_6, %c0_7], %7 {strides = array<i32>} : memref<8x128xf32, #tpu.memory_space<vmem>>, vector<8x128xf32>,
    return
  }
  func.func @transform_0(%arg0: i32, %arg1: i32) -> (i32, i32) {
    %c0_i32 = arith.constant 0 : i32
    %c0_i32_0 = arith.constant 0 : i32
    return %arg0, %c0_i32 : i32, i32
  }
  func.func @transform_1(%arg0: i32, %arg1: i32) -> (i32, i32) {
    %c0_i32 = arith.constant 0 : i32
    %c0_i32_0 = arith.constant 0 : i32
    return %c0_i32, %arg1 : i32, i32
  }
  func.func @transform_2(%arg0: i32, %arg1: i32) -> (i32, i32) {
    %c0_i32 = arith.constant 0 : i32
    %c0_i32_0 = arith.constant 0 : i32
    return %c0_i32, %arg1 : i32, i32
  }
  func.func @transform_3(%arg0: i32, %arg1: i32) -> (i32, i32) {
    %c0_i32 = arith.constant 0 : i32
    return %arg0, %arg1 : i32, i32
  }
}

</mosaic_0001>

<llo_original>
// kernel: plain_net.1
$region0: #{plain_net.1}
  #allocation0 [shape = 'u32[]', space=smem, size = 0x4, offset = 0x4, fixed_abs, tag = 'smem constant byte address 0x4 - core index']
  #allocation1 [shape = 'u32[144,128]{1,0:T(1,128)}', space=vmem, size = 0x12000, scoped, tag = 'internal scratch']
  %s0 = inlined_call_operand.vmem [shape: f32[8,128], index: 0, kind: input, shape index: {}]
  %s1 = inlined_call_operand.vmem [shape: f32[128,128], index: 1, kind: input, shape index: {}]
  %s2 = inlined_call_operand.vmem [shape: f32[1,128], index: 2, kind: input, shape index: {}]
  %s3 = inlined_call_operand.hbm [shape: f32[8,128], index: 3, kind: output, shape index: {}]
  %s4 = sld [smem:[#allocation0]]
  $region22: #{plain_net.1} parent=0
    _
  %s6 = ssub.s32 1, %s4
  %s7 = scalar_select 0, %s6, %s4
  $region1: #{plain_net.1} parent=0
    #allocation2 [shape = 'u8[4096]{0}', space=vmem, size = 0x1000, scoped, tag = 'output window, operand 0, single buffered']
    #allocation3 [shape = 's32[1]{0}', space=sflag, size = 0x4, scoped, tag = 'scoped memory for plain_net.1']
    %8 = vsyncpa [#allocation3], 0
    // Predicated region
    $region2: #{plain_net.1} parent=1 // pred_check
      _
    $region3: #{plain_net.1} parent=1 // pred_check_branch
      %10 = sbr.rel (0) target = $region5
    $region4: #{plain_net.1} parent=1 // pred_region
      _
    $region5: #{plain_net.1} parent=1 // pred_fallthru
      _
    // Predicated region
    $region6: #{plain_net.1} parent=1 // pred_check
      _
    $region7: #{plain_net.1} parent=1 // pred_check_branch
      %12 = sbr.rel (0) target = $region9
    $region8: #{plain_net.1} parent=1 // pred_region
      _
    $region9: #{plain_net.1} parent=1 // pred_fallthru
      _
    // Predicated region
    $region10: #{plain_net.1} parent=1 // pred_check
      _
    $region11: #{plain_net.1} parent=1 // pred_check_branch
      %14 = sbr.rel (0) target = $region13
    $region12: #{plain_net.1} parent=1 // pred_region
      _
    $region13: #{plain_net.1} parent=1 // pred_fallthru
      _
    %v15 = vld [vmem:[%s0] sm:$0xff]
    %v16 = vld [vmem:[%s1] sm:$0xff]
    %v17 = vld [vmem:[%s1 + $0x8] sm:$0xff]
    %v18 = vld [vmem:[%s1 + $0x10] sm:$0xff]
    %v19 = vld [vmem:[%s1 + $0x18] sm:$0xff]
    %v20 = vld [vmem:[%s1 + $0x20] sm:$0xff]
    %v21 = vld [vmem:[%s1 + $0x28] sm:$0xff]
    %v22 = vld [vmem:[%s1 + $0x30] sm:$0xff]
    %v23 = vld [vmem:[%s1 + $0x38] sm:$0xff]
    %v24 = vld [vmem:[%s1 + $0x40] sm:$0xff]
    %v25 = vld [vmem:[%s1 + $0x48] sm:$0xff]
    %v26 = vld [vmem:[%s1 + $0x50] sm:$0xff]
    %v27 = vld [vmem:[%s1 + $0x58] sm:$0xff]
    %v28 = vld [vmem:[%s1 + $0x60] sm:$0xff]
    %v29 = vld [vmem:[%s1 + $0x68] sm:$0xff]
    %v30 = vld [vmem:[%s1 + $0x70] sm:$0xff]
    %v31 = vld [vmem:[%s1 + $0x78] sm:$0xff]
    %v32 = vld [vmem:[%s2] sm:$0x1]
    %v34 = vlaneseq
    %v35 = vshrl.u32 %v34, 7
    %v36 = vsub.s32 0, %v35
    %v37 = vrot.slane %v32, %v36
    %39 = vmatprep.subr.mxu0 0.0
    %40 = vmatpush1.msra.mxu0 %v16
    %41 = vmatprep.subr.mxu0 0.0
    %42 = vmatpush1.msra.mxu0 %v17
    %43 = vmatprep.subr.mxu0 0.0
    %44 = vmatpush1.msra.mxu0 %v18
    %45 = vmatprep.subr.mxu0 0.0
    %46 = vmatpush1.msra.mxu0 %v19
    %47 = vmatprep.subr.mxu0 0.0
    %48 = vmatpush1.msra.mxu0 %v20
    %49 = vmatprep.subr.mxu0 0.0
    %50 = vmatpush1.msra.mxu0 %v21
    %51 = vmatprep.subr.mxu0 0.0
    %52 = vmatpush1.msra.mxu0 %v22
    %53 = vmatprep.subr.mxu0 0.0
    %54 = vmatpush1.msra.mxu0 %v23
    %55 = vmatprep.subr.mxu0 0.0
    %56 = vmatpush1.msra.mxu0 %v24
    %57 = vmatprep.subr.mxu0 0.0
    %58 = vmatpush1.msra.mxu0 %v25
    %59 = vmatprep.subr.mxu0 0.0
    %60 = vmatpush1.msra.mxu0 %v26
    %61 = vmatprep.subr.mxu0 0.0
    %62 = vmatpush1.msra.mxu0 %v27
    %63 = vmatprep.subr.mxu0 0.0
    %64 = vmatpush1.msra.mxu0 %v28
    %65 = vmatprep.subr.mxu0 0.0
    %66 = vmatpush1.msra.mxu0 %v29
    %67 = vmatprep.subr.mxu0 0.0
    %68 = vmatpush1.msra.mxu0 %v30
    %69 = vmatprep.subr.mxu0 0.0
    %70 = vmatpush1.msra.mxu0 %v31
    %71 = vmatprep.subr.mxu0 0.0
    %72 = vmatpush1.msra.mxu0 0.0
    %73 = vmatprep.subr.mxu0 0.0
    %74 = vmatpush1.msra.mxu0 0.0
    %75 = vmatprep.subr.mxu0 0.0
    %76 = vmatpush1.msra.mxu0 0.0
    %77 = vmatprep.subr.mxu0 0.0
    %78 = vmatpush1.msra.mxu0 0.0
    %79 = vmatprep.subr.mxu0 0.0
    %80 = vmatpush1.msra.mxu0 0.0
    %81 = vmatprep.subr.mxu0 0.0
    %82 = vmatpush1.msra.mxu0 0.0
    %83 = vmatprep.subr.mxu0 0.0
    %84 = vmatpush1.msra.mxu0 0.0
    %85 = vmatprep.subr.mxu0 0.0
    %86 = vmatpush1.msra.mxu0 0.0
    %87 = vmatprep.subr.mxu0 0.0
    %88 = vmatpush1.msra.mxu0 0.0
    %89 = vmatprep.subr.mxu0 0.0
    %90 = vmatpush1.msra.mxu0 0.0
    %91 = vmatprep.subr.mxu0 0.0
    %92 = vmatpush1.msra.mxu0 0.0
    %93 = vmatprep.subr.mxu0 0.0
    %94 = vmatpush1.msra.mxu0 0.0
    %95 = vmatprep.subr.mxu0 0.0
    %96 = vmatpush1.msra.mxu0 0.0
    %97 = vmatprep.subr.mxu0 0.0
    %98 = vmatpush1.msra.mxu0 0.0
    %99 = vmatprep.subr.mxu0 0.0
    %100 = vmatpush1.msra.mxu0 0.0
    %101 = vmatprep.subr.mxu0 0.0
    %102 = vmatpush1.msra.mxu0 0.0
    %103 = vmatprep.mubr.f32.mxu0 0.0
    %104 = vmatmul.mubr.f32.gmra.mrb[0].mxu0 %v15
    %v105 = vpop.f32.mrb[0].mxu0
    %v106 = vadd.f32 %v37, %v105
    %v107 = vpop.f32.mrb[0].mxu0
    %108 = vdwg.mxu0
    %v109 = vmax.f32 %v106, 0.0
    %110 = vst [vmem:[#allocation2] sm:$0xff] %v109
    // Predicated region
    $region14: #{plain_net.1} parent=1 // pred_check
      _
    $region15: #{plain_net.1} parent=1 // pred_check_branch
      %112 = sbr.rel (0) target = $region17
    $region16: #{plain_net.1} parent=1 // pred_region
      %s114 = ssub.s32 128, 128
      %115 = vsyncadd [#allocation3], %s114
      %s117 = sshll.u32 [#allocation2], 4
      %s118 = int_to_ptr.vmem [resolvable:$true] %s117
      %120 = dma.vmem_to_hbm [thread:$0]  %s118, 128, %s3, [#allocation3]
    $region17: #{plain_net.1} parent=1 // pred_fallthru
      _
    // Predicated region
    $region18: #{plain_net.1} parent=1 // pred_check
      _
    $region19: #{plain_net.1} parent=1 // pred_check_branch
      %122 = sbr.rel (0) target = $region21
    $region20: #{plain_net.1} parent=1 // pred_region
      %123 = dma.done [#allocation3], 128
    $region21: #{plain_net.1} parent=1 // pred_fallthru
      _
    %124 = vsyncpa [#allocation3], 1

</llo_original>
